<compile_context>
chip_gen: v5e
topology: v5e:2x2
jax: 0.10.0
libtpu: 0.0.40
codegen_flags: <defaults>
</compile_context>

<pallas_src>
import jax
import jax.numpy as jnp
from jax.experimental import pallas as pl
from jax.experimental.pallas import tpu as pltpu


def _round_up(x, m):
    return ((x + m - 1) // m) * m


def _patch_embed_kernel(x_ref, w_ref, b_ref, o_ref):
    # x_ref: (tm, K)  patch rows (compute dtype: f32 or bf16)
    # w_ref: (K, E)   projection weight (compute dtype), VMEM-resident
    # b_ref: (1, E)   bias (f32)
    # o_ref: (tm, E)
    acc = jnp.dot(x_ref[...], w_ref[...], preferred_element_type=jnp.float32)
    o_ref[...] = (acc + b_ref[...]).astype(o_ref.dtype)


def _choose_tm(M, K, E, in_bytes, out_bytes):
    """Pick the M (patch-row) tile.

    Targets: fit a v5e-safe (<= 12 MiB) VMEM working set, cap at 512 rows
    (HBM roofline saturates there), prefer >= 4 grid steps with an even step
    count (balanced across v7x's 2 TensorCores, real pipeline depth), and
    prefer tiles that divide M (no ragged masked tail).
    """
    # Layout-padded sizes for the estimate (lane dim -> 128, sublane -> 8).
    K_l = _round_up(K, 128)
    E_l = _round_up(E, 128)
    budget = 12 * 1024 * 1024
    per_row = 2 * K_l * in_bytes + 2 * E_l * out_bytes + E_l * 4
    cap = max(8, budget // per_row)
    cap = int(min(cap, 512))
    cap -= cap % 8
    cap = max(cap, 8)

    if M <= cap:
        # Small problem: split into >= 4 even steps if tiles stay 8-aligned.
        for steps in (8, 4, 2):
            if M % steps == 0 and (M // steps) % 8 == 0:
                return M // steps
        if M >= 64:
            return _round_up(pl.cdiv(M, 4), 8)   # ~4 steps, ragged masked tail
        return M                                  # single full-extent block

    # Prefer a divisor tile, ideally with an even step count >= 4.
    fallback = None
    t = cap
    while t >= 8:
        if M % t == 0:
            steps = M // t
            if steps >= 4 and steps % 2 == 0:
                return t
            if fallback is None:
                fallback = t
        t -= 8
    if fallback is not None:
        return fallback
    return cap  # ragged last tile; Pallas masks the partial writes


def _pallas_patch_matmul(patches, w, bias2d, *, tm, out_dtype):
    M, K = patches.shape
    _, E = w.shape
    eb_in = patches.dtype.itemsize
    eb_out = jnp.dtype(out_dtype).itemsize

    # Explicit VMEM limit matching (a conservative version of) the working set:
    # double-buffered input & output tiles, the f32 dot accumulator temp, and
    # the weight counted twice even though we request single buffering.
    K_l = _round_up(K, 128)
    E_l = _round_up(E, 128)
    tm_l = _round_up(tm, 8)
    working = (2 * tm_l * K_l * eb_in          # input tile (double-buffered)
               + 2 * tm_l * E_l * eb_out      # output tile (double-buffered)
               + tm_l * E_l * 4               # f32 accumulator temp
               + 2 * K_l * E_l * eb_in        # weight (conservative x2)
               + 2 * 8 * E_l * 4)             # bias
    vmem_limit = int(min(32 * 1024 * 1024,
                         max(working * 5 // 4 + (2 << 20), 4 << 20)))

    cost = pl.CostEstimate(
        flops=2 * M * K * E,
        transcendentals=0,
        bytes_accessed=M * K * eb_in + K * E * eb_in + M * E * eb_out + E * 4,
    )

    grid = (pl.cdiv(M, tm),)
    return pl.pallas_call(
        _patch_embed_kernel,
        out_shape=jax.ShapeDtypeStruct((M, E), out_dtype),
        grid_spec=pltpu.PrefetchScalarGridSpec(
            num_scalar_prefetch=0,
            grid=grid,
            in_specs=[
                # TODO(synk): sweep pipeline_mode=pl.Buffered(3) here if the
                # profile shows exposed input DMA at ~512-row tiles.
                pl.BlockSpec((tm, K), lambda i: (i, 0)),
                # Constant block index -> parameters stay resident in VMEM;
                # Buffered(1) avoids a pointless second parameter buffer.
                pl.BlockSpec((K, E), lambda i: (0, 0),
                             pipeline_mode=pl.Buffered(1)),
                pl.BlockSpec((1, E), lambda i: (0, 0),
                             pipeline_mode=pl.Buffered(1)),
            ],
            # Full-extent last dim (== E) is always layout-legal; no padding.
            out_specs=pl.BlockSpec((tm, E), lambda i: (i, 0)),
        ),
        compiler_params=pltpu.CompilerParams(
            dimension_semantics=("parallel",),
            vmem_limit_bytes=vmem_limit,
            # Let XLA fold the wrapper-side im2col transpose/cast into the
            # patches operand instead of doing an extra HBM round trip.
            allow_input_fusion=[True, False, False],
        ),
        cost_estimate=cost,
    )(patches, w, bias2d)


class PatchEmbedPallas:
    """2D Image to Patch Embedding (Pallas TPU). norm_layer=None -> Identity."""

    def __init__(self, img_size=16, patch_size=4, in_chans=4, embed_dim=32,
                 flatten=True, compute_dtype=jnp.bfloat16, key=None):
        self.img_size = (img_size, img_size)
        self.patch_size = (patch_size, patch_size)
        self.grid_size = (img_size // patch_size, img_size // patch_size)
        self.num_patches = self.grid_size[0] * self.grid_size[1]
        self.flatten = flatten
        self.in_chans = in_chans
        self.embed_dim = embed_dim
        self.compute_dtype = compute_dtype

        if key is None:
            key = jax.random.PRNGKey(0)
        kw, kb = jax.random.split(key)
        # Conv2d weight: (embed_dim, in_chans, ph, pw); bias: (embed_dim,)
        fan_in = in_chans * patch_size * patch_size
        self.weight = (jax.random.normal(
            kw, (embed_dim, in_chans, patch_size, patch_size), jnp.float32)
            * (1.0 / jnp.sqrt(fan_in)))
        self.bias = jax.random.normal(kb, (embed_dim,), jnp.float32) * 0.02
        # norm_layer=None -> Identity (no params).

        # Precompute matmul-form parameters ONCE (no per-call reshape/transpose).
        # No E padding: full-extent last-dim blocks are layout-legal and avoid
        # writing padded HBM bytes + a post-call slice pass.
        K = in_chans * patch_size * patch_size
        self.K = K
        self.w_mat = self.weight.reshape(embed_dim, K).T.astype(compute_dtype)  # (K, E)
        self.b2d = self.bias.reshape(1, embed_dim).astype(jnp.float32)          # (1, E)

    def __call__(self, x):
        # x: (B, C, H, W) float32 (NCHW, like PyTorch)
        B, C, H, W = x.shape
        ph, pw = self.patch_size
        Gh, Gw = H // ph, W // pw
        assert (C, Gh, Gw) == (self.in_chans, self.grid_size[0], self.grid_size[1])

        # im2col as a single XLA transpose+cast; with allow_input_fusion set on
        # the pallas_call the compiler may fold it into the input DMA rather
        # than materializing the patch matrix in HBM.
        xp = x.reshape(B, C, Gh, ph, Gw, pw)
        xp = jnp.transpose(xp, (0, 2, 4, 1, 3, 5))
        patches = xp.reshape(B * Gh * Gw, C * ph * pw).astype(self.compute_dtype)

        M, K = patches.shape
        eb = jnp.dtype(self.compute_dtype).itemsize
        tm = _choose_tm(M, K, self.embed_dim, eb, eb)

        out = _pallas_patch_matmul(patches, self.w_mat, self.b2d, tm=tm,
                                   out_dtype=self.compute_dtype)
        out = out.reshape(B, Gh * Gw, self.embed_dim)
        if not self.flatten:
            # (B, E, Gh, Gw) conv-output layout
            out = jnp.transpose(out.reshape(B, Gh, Gw, self.embed_dim),
                                (0, 3, 1, 2))
        # norm = Identity
        return out


def _reference(x, weight, bias, patch_size, flatten=True):
    # Pure-JAX reference: strided conv == patch matmul.
    y = jax.lax.conv_general_dilated(
        x, weight, window_strides=(patch_size, patch_size), padding="VALID",
        dimension_numbers=("NCHW", "OIHW", "NCHW"))
    y = y + bias.reshape(1, -1, 1, 1)
    if flatten:
        B, E, Gh, Gw = y.shape
        y = y.reshape(B, E, Gh * Gw).transpose(0, 2, 1)
    return y


if __name__ == "__main__":
    key = jax.random.PRNGKey(0)
    k_img, k_par = jax.random.split(key)

    B, C, H, W = 2, 4, 16, 16
    patch = 4
    embed_dim = 32

    x = jax.random.normal(k_img, (B, C, H, W), jnp.float32)

    # ---- f32 path: tight check against the conv reference ----
    mod = PatchEmbedPallas(img_size=H, patch_size=patch, in_chans=C,
                           embed_dim=embed_dim, flatten=True,
                           compute_dtype=jnp.float32, key=k_par)
    fwd = jax.jit(lambda inp: mod(inp))
    out = jax.block_until_ready(fwd(x))

    ref = _reference(x, mod.weight, mod.bias, patch, flatten=True)
    assert out.shape == (B, (H // patch) * (W // patch), embed_dim), out.shape
    assert jnp.allclose(out, ref, atol=1e-4, rtol=1e-4), float(
        jnp.max(jnp.abs(out - ref)))

    # ---- flatten=False (conv-layout output) path ----
    mod_nf = PatchEmbedPallas(img_size=H, patch_size=patch, in_chans=C,
                              embed_dim=embed_dim, flatten=False,
                              compute_dtype=jnp.float32, key=k_par)
    out_nf = jax.block_until_ready(jax.jit(lambda inp: mod_nf(inp))(x))
    ref_nf = _reference(x, mod_nf.weight, mod_nf.bias, patch, flatten=False)
    assert out_nf.shape == (B, embed_dim, H // patch, W // patch), out_nf.shape
    assert jnp.allclose(out_nf, ref_nf, atol=1e-4, rtol=1e-4)

    # ---- bf16 operand path (default): f32 MXU accumulation, bf16 output ----
    mod_bf16 = PatchEmbedPallas(img_size=H, patch_size=patch, in_chans=C,
                                embed_dim=embed_dim, flatten=True,
                                compute_dtype=jnp.bfloat16, key=k_par)
    fwd_bf16 = jax.jit(lambda inp: mod_bf16(inp))
    out_bf16 = jax.block_until_ready(fwd_bf16(x))
    assert out_bf16.shape == out.shape
    assert out_bf16.dtype == jnp.bfloat16
    assert jnp.allclose(out_bf16.astype(jnp.float32), ref,
                        atol=5e-2, rtol=5e-2), float(
        jnp.max(jnp.abs(out_bf16.astype(jnp.float32) - ref)))

    print("KERNEL_OK")
</pallas_src>

<mosaic_0001>
module attributes {stable_mosaic.version = 11 : i64} {
  func.func @_patch_embed_kernel(%arg0: i32, %arg1: memref<8x64xf32, #tpu.memory_space<vmem>>, %arg2: memref<64x32xf32, #tpu.memory_space<vmem>>, %arg3: memref<1x32xf32, #tpu.memory_space<vmem>>, %arg4: memref<8x32xf32, #tpu.memory_space<vmem>>) attributes {dimension_semantics = [#tpu.dimension_semantics<parallel>], iteration_bounds = array<i64: 4>, scalar_prefetch = 0 : i64, scratch_operands = 0 : i64, tpu.core_type = #tpu.core_type<tc>, window_params = [{transform_indices = @transform_0, window_bounds = array<i64: 8, 64>}, {pipeline_mode = #tpu.pipeline_mode<synchronous>, transform_indices = @transform_1, window_bounds = array<i64: 64, 32>}, {pipeline_mode = #tpu.pipeline_mode<synchronous>, transform_indices = @transform_2, window_bounds = array<i64: 1, 32>}, {transform_indices = @transform_3, window_bounds = array<i64: 8, 32>}]} {
    %c0 = arith.constant 0 : index
    %c0_0 = arith.constant 0 : index
    %0 = vector.load %arg1[%c0, %c0_0] : memref<8x64xf32, #tpu.memory_space<vmem>>, vector<8x64xf32>
    %c0_1 = arith.constant 0 : index
    %c0_2 = arith.constant 0 : index
    %1 = vector.load %arg2[%c0_1, %c0_2] : memref<64x32xf32, #tpu.memory_space<vmem>>, vector<64x32xf32>
    %cst = arith.constant dense<0.000000e+00> : vector<8x32xf32>
    %2 = tpu.matmul %0, %1, %cst {dimension_numbers = #tpu.dot_dimension_numbers<[1], [0], [0], [1], [0, 0, 1, 1], [], []>} : vector<8x64xf32>, vector<64x32xf32>, vector<8x32xf32> -> vector<8x32xf32>
    %c0_3 = arith.constant 0 : index
    %c0_4 = arith.constant 0 : index
    %3 = vector.load %arg3[%c0_3, %c0_4] : memref<1x32xf32, #tpu.memory_space<vmem>>, vector<1x32xf32>
    %4 = vector.broadcast %3 : vector<1x32xf32> to vector<8x32xf32>
    %5 = arith.addf %2, %4 : vector<8x32xf32>
    %c0_5 = arith.constant 0 : index
    %c0_6 = arith.constant 0 : index
    %6 = vector.load %arg4[%c0_5, %c0_6] : memref<8x32xf32, #tpu.memory_space<vmem>>, vector<8x32xf32>
    tpu.vector_store %arg4[%c0_5, %c0_6], %5 {strides = array<i32>} : memref<8x32xf32, #tpu.memory_space<vmem>>, vector<8x32xf32>,
    return
  }
  func.func @transform_0(%arg0: i32) -> (i32, i32) {
    %c0_i32 = arith.constant 0 : i32
    %c0_i32_0 = arith.constant 0 : i32
    return %arg0, %c0_i32 : i32, i32
  }
  func.func @transform_1(%arg0: i32) -> (i32, i32) {
    %c0_i32 = arith.constant 0 : i32
    %c0_i32_0 = arith.constant 0 : i32
    %c0_i32_1 = arith.constant 0 : i32
    return %c0_i32, %c0_i32_0 : i32, i32
  }
  func.func @transform_2(%arg0: i32) -> (i32, i32) {
    %c0_i32 = arith.constant 0 : i32
    %c0_i32_0 = arith.constant 0 : i32
    %c0_i32_1 = arith.constant 0 : i32
    return %c0_i32, %c0_i32_0 : i32, i32
  }
  func.func @transform_3(%arg0: i32) -> (i32, i32) {
    %c0_i32 = arith.constant 0 : i32
    %c0_i32_0 = arith.constant 0 : i32
    return %arg0, %c0_i32 : i32, i32
  }
}

</mosaic_0001>

<llo_original>
// kernel: _lambda_.1
$region0: #{_lambda_.1}
  #allocation0 [shape = 'u32[]', space=smem, size = 0x4, offset = 0x4, fixed_abs, tag = 'smem constant byte address 0x4 - core index']
  #allocation1 [shape = 'u32[72,128]{1,0:T(1,128)}', space=vmem, size = 0x9000, scoped, tag = 'internal scratch']
  %s0 = inlined_call_operand.vmem [shape: f32[32,64], index: 0, kind: input, shape index: {}]
  %s1 = inlined_call_operand.vmem [shape: f32[64,32], index: 1, kind: input, shape index: {}]
  %s2 = inlined_call_operand.vmem [shape: f32[1,32], index: 2, kind: input, shape index: {}]
  %s3 = inlined_call_operand.hbm [shape: f32[32,32], index: 3, kind: output, shape index: {}]
  %s4 = sld [smem:[#allocation0]]
  $region45: #{_lambda_.1} parent=0
    _
  %s6 = ssub.s32 1, %s4
  %s7 = scalar_select 0, %s6, %s4
  $region1: #{_lambda_.1} parent=0
    #allocation2 [shape = 'u8[8192]{0}', space=vmem, size = 0x2000, scoped, tag = 'output window, operand 0']
    #allocation3 [shape = 's32[2]{0}', space=sflag, size = 0x8, scoped, tag = 'scoped memory for _lambda_.1']
    %8 = vsyncpa [#allocation3], 0
    %s9 = scalar_lea.sflag [#allocation3], 1
    %10 = vsyncpa %s9, 0
    loop: start=0, step=1, limit=6
    $region2: #{_lambda_.1} parent=1 // loop_pre_header
      _
    $region3: #{_lambda_.1} parent=1 // loop_header
      %s12 = sphi 0, %s16
      %p13 = scmp.ge.s32.totalorder %s12, 6
      %s22 = sphi 0, %s24
      %s25 = sphi 0, %s22
      %s26 = sphi 0, %s25
      %s42 = sphi 0, %s26
      %s46 = sphi 0, %s46
      %s48 = sphi 0, %s46
      %s49 = sphi 0, %s48
      %s63 = sphi 0, %s49
      %s67 = sphi 0, %s67
      %s69 = sphi 0, %s67
      %s70 = sphi 0, %s69
      %s84 = sphi 0, %s70
      %s90 = sphi 0, %s92
      %s93 = sphi 0, %s90
      %s94 = sphi 0, %s93
      %s110 = sphi 0, %s94
    $region4: #{_lambda_.1} parent=1 // loop_header_branch
      %15 = sbr.rel (%p13) target = $region8
    $region5: #{_lambda_.1} parent=1 // loop_body
      %s17 = ssub.s32 %s12, 1
      %s18 = ssub.s32 %s12, 2
      %s19 = sadd.s32 %s12, 1
      %s20 = ssub.s32 %s12, %s19
      %p21 = scmp.eq.s32.totalorder %s20, 0
      %s23 = sadd.s32 %s22, 1
      %s24 = scalar_select %p21, %s22, %s23
      %p27 = pneg %p21
      %p28 = scmp.eq.s32.totalorder %s12, 3
      %p29 = por %p27, %p28
      %p30 = scmp.ne.s32.totalorder %s22, %s25
      %p31 = scmp.eq.s32.totalorder %s12, 0
      %p32 = por %p30, %p31
      %p33 = scmp.ne.s32.totalorder %s22, %s25
      %p34 = scmp.eq.s32.totalorder %s17, 3
      %p35 = por %p33, %p34
      %p36 = scmp.ne.s32.totalorder %s25, %s26
      %p37 = scmp.eq.s32.totalorder %s17, 0
      %p38 = por %p36, %p37
      %p39 = scmp.ne.s32.totalorder %s25, %s26
      %p40 = scmp.eq.s32.totalorder %s18, 3
      %p41 = por %p39, %p40
      %p43 = scmp.ne.s32.totalorder %s26, %s42
      %p44 = scmp.eq.s32.totalorder %s18, 0
      %p45 = por %p43, %p44
      %s47 = sadd.s32 %s46, 1
      %p50 = scmp.eq.s32.totalorder %s12, 3
      %p51 = scmp.ne.s32.totalorder %s46, %s48
      %p52 = scmp.eq.s32.totalorder %s12, 0
      %p53 = por %p51, %p52
      %p54 = scmp.ne.s32.totalorder %s46, %s48
      %p55 = scmp.eq.s32.totalorder %s17, 3
      %p56 = por %p54, %p55
      %p57 = scmp.ne.s32.totalorder %s48, %s49
      %p58 = scmp.eq.s32.totalorder %s17, 0
      %p59 = por %p57, %p58
      %p60 = scmp.ne.s32.totalorder %s48, %s49
      %p61 = scmp.eq.s32.totalorder %s18, 3
      %p62 = por %p60, %p61
      %p64 = scmp.ne.s32.totalorder %s49, %s63
      %p65 = scmp.eq.s32.totalorder %s18, 0
      %p66 = por %p64, %p65
      %s68 = sadd.s32 %s67, 1
      %p71 = scmp.eq.s32.totalorder %s12, 3
      %p72 = scmp.ne.s32.totalorder %s67, %s69
      %p73 = scmp.eq.s32.totalorder %s12, 0
      %p74 = por %p72, %p73
      %p75 = scmp.ne.s32.totalorder %s67, %s69
      %p76 = scmp.eq.s32.totalorder %s17, 3
      %p77 = por %p75, %p76
      %p78 = scmp.ne.s32.totalorder %s69, %s70
      %p79 = scmp.eq.s32.totalorder %s17, 0
      %p80 = por %p78, %p79
      %p81 = scmp.ne.s32.totalorder %s69, %s70
      %p82 = scmp.eq.s32.totalorder %s18, 3
      %p83 = por %p81, %p82
      %p85 = scmp.ne.s32.totalorder %s70, %s84
      %p86 = scmp.eq.s32.totalorder %s18, 0
      %p87 = por %p85, %p86
      %s88 = ssub.s32 %s12, %s19
      %p89 = scmp.eq.s32.totalorder %s88, 0
      %s91 = sadd.s32 %s90, 1
      %s92 = scalar_select %p89, %s90, %s91
      %p95 = pneg %p89
      %p96 = scmp.eq.s32.totalorder %s12, 3
      %p97 = por %p95, %p96
      %p98 = scmp.ne.s32.totalorder %s90, %s93
      %p99 = scmp.eq.s32.totalorder %s12, 0
      %p100 = por %p98, %p99
      %p101 = scmp.ne.s32.totalorder %s90, %s93
      %p102 = scmp.eq.s32.totalorder %s17, 3
      %p103 = por %p101, %p102
      %p104 = scmp.ne.s32.totalorder %s93, %s94
      %p105 = scmp.eq.s32.totalorder %s17, 0
      %p106 = por %p104, %p105
      %p107 = scmp.ne.s32.totalorder %s93, %s94
      %p108 = scmp.eq.s32.totalorder %s18, 3
      %p109 = por %p107, %p108
      %p111 = scmp.ne.s32.totalorder %s94, %s110
      %p112 = scmp.eq.s32.totalorder %s18, 0
      %p113 = por %p111, %p112
      %p114 = scmp.le.s32.totalorder 1, %s12
      %p115 = scmp.lt.s32.totalorder %s12, 5
      %p116 = pnand %p114, %p115
      %p117 = pneg %p116
      // Predicated region
      $region9: #{_lambda_.1} parent=5 // pred_check
        _
      $region10: #{_lambda_.1} parent=5 // pred_check_branch
        %119 = sbr.rel (%p116) target = $region12
      $region11: #{_lambda_.1} parent=5 // pred_region
        %s120 = ssub.s32 %s12, 1
        // Predicated region
        $region13: #{_lambda_.1} parent=11 // pred_check
          %p121 = pneg %p59
        $region14: #{_lambda_.1} parent=11 // pred_check_branch
          %123 = sbr.rel (%p121) target = $region16
        $region15: #{_lambda_.1} parent=11 // pred_region
          _
        $region16: #{_lambda_.1} parent=11 // pred_fallthru
          _
        // Predicated region
        $region17: #{_lambda_.1} parent=11 // pred_check
          %p124 = pneg %p80
        $region18: #{_lambda_.1} parent=11 // pred_check_branch
          %126 = sbr.rel (%p124) target = $region20
        $region19: #{_lambda_.1} parent=11 // pred_region
          _
        $region20: #{_lambda_.1} parent=11 // pred_fallthru
          _
      $region12: #{_lambda_.1} parent=5 // pred_fallthru
        _
      %p127 = scmp.lt.s32.totalorder %s12, 4
      // Predicated region
      $region21: #{_lambda_.1} parent=5 // pred_check
        %p128 = pneg %p127
      $region22: #{_lambda_.1} parent=5 // pred_check_branch
        %130 = sbr.rel (%p128) target = $region24
      $region23: #{_lambda_.1} parent=5 // pred_region
        // Predicated region
        $region25: #{_lambda_.1} parent=23 // pred_check
          %p131 = pneg %p32
        $region26: #{_lambda_.1} parent=23 // pred_check_branch
          %133 = sbr.rel (%p131) target = $region28
        $region27: #{_lambda_.1} parent=23 // pred_region
          %p134 = scmp.lt.s32.totalorder %s12, 3
          %s135 = scalar_select %p134, %s12, 3
          %s136 = smul.addr %s135, 8
          %s137 = scalar_lea.vmem %s0, %s136
        $region28: #{_lambda_.1} parent=23 // pred_fallthru
          _
      $region24: #{_lambda_.1} parent=5 // pred_fallthru
        _
      %p138 = scmp.le.s32.totalorder 1, %s12
      %p139 = scmp.lt.s32.totalorder %s12, 5
      %p140 = pnand %p138, %p139
      %p141 = pneg %p140
      // Predicated region
      $region29: #{_lambda_.1} parent=5 // pred_check
        _
      $region30: #{_lambda_.1} parent=5 // pred_check_branch
        %143 = sbr.rel (%p140) target = $region32
      $region31: #{_lambda_.1} parent=5 // pred_region
        %s144 = ssub.s32 %s12, 1
        %p145 = scmp.lt.s32.totalorder %s17, 3
        %s146 = scalar_select %p145, %s17, 3
        %s147 = smul.addr %s146, 8
        %s148 = scalar_lea.vmem %s0, %s147
        %p149 = pneg %p38
        %p150 = pneg %p35
        %p151 = pneg %p59
        %p152 = pneg %p56
        %p153 = pneg %p80
        %p154 = pneg %p77
        %p155 = pneg %p106
        %p156 = pneg %p103
        %s157 = sand.u32 %s93, 1
        %s158 = scalar_lea.sflag [#allocation3], %s157
        %s159 = sand.u32 %s93, 1
        %s160 = smul.addr %s159, 8
        %s161 = scalar_lea.vmem [#allocation2], %s160
        %p162 = scmp.lt.s32.totalorder %s17, 3
        %s163 = scalar_select %p162, %s17, 3
        %s164 = smul.addr %s163, 8
        %s165 = scalar_lea.vmem %s0, %s164
        %v166 = vld [vmem:[%s165] sm:$0xff]
        %v167 = vld [vmem:[%s1] sm:$0xff]
        %v168 = vld [vmem:[%s1 + $0x8] sm:$0xff]
        %v169 = vld [vmem:[%s1 + $0x10] sm:$0xff]
        %v170 = vld [vmem:[%s1 + $0x18] sm:$0xff]
        %v171 = vld [vmem:[%s1 + $0x20] sm:$0xff]
        %v172 = vld [vmem:[%s1 + $0x28] sm:$0xff]
        %v173 = vld [vmem:[%s1 + $0x30] sm:$0xff]
        %v174 = vld [vmem:[%s1 + $0x38] sm:$0xff]
        %v175 = vld [vmem:[%s2] sm:$0x1]
        %v177 = vperm.slane %v175, 0
        %vm179 = vcmask 523264
        %v181 = vsel %vm179, %v166, 0
        %183 = vmatpush.msra.mxu0 0.0
        %184 = vmatpush.msra.mxu0 0.0
        %185 = vmatpush.msra.mxu0 0.0
        %186 = vmatpush.msra.mxu0 0.0
        %187 = vmatpush.msra.mxu0 0.0
        %188 = vmatpush.msra.mxu0 0.0
        %189 = vmatpush.msra.mxu0 0.0
        %190 = vmatpush.msra.mxu0 0.0
        %191 = vmatpush.msra.mxu0 %v174
        %192 = vmatpush.msra.mxu0 %v173
        %193 = vmatpush.msra.mxu0 %v172
        %194 = vmatpush.msra.mxu0 %v171
        %195 = vmatpush.msra.mxu0 %v170
        %196 = vmatpush.msra.mxu0 %v169
        %197 = vmatpush.msra.mxu0 %v168
        %198 = vmatpush.msra.mxu0 %v167
        %199 = vmatmul.f32.gmra.mxu0 %v181
        %v200 = vpop.f32.mrf.mxu0
        %v201 = vadd.f32 %v177, %v200
        %202 = vdwg.mxu0
        %vm203 = vcmask 261120
        %204 = vst.msk [vmem:[%s161] sm:$0xff] %vm203, %v201
        %s205 = sand.u32 %s93, 1
        %s206 = scalar_lea.sflag [#allocation3], %s205
        %s207 = sand.u32 %s93, 1
        %s208 = smul.addr %s207, 8
        %s209 = scalar_lea.vmem [#allocation2], %s208
        // Predicated region
        $region33: #{_lambda_.1} parent=31 // pred_check
          %p210 = pneg %p103
        $region34: #{_lambda_.1} parent=31 // pred_check_branch
          %212 = sbr.rel (%p210) target = $region36
        $region35: #{_lambda_.1} parent=31 // pred_region
          %214 = vsyncadd %s206, 0
          %s215 = smul.addr %s17, 8
          %s216 = scalar_lea.hbm %s3, %s215
          %s218 = sshll.u32 %s209, 4
          %s219 = int_to_ptr.vmem [resolvable:$true] %s218
          %s220 = sshll.u32 %s216, 4
          %s221 = int_to_ptr.hbm [resolvable:$true] %s220
          %223 = dma.vmem_to_hbm [thread:$0]  %s219, 128, %s221, %s206
        $region36: #{_lambda_.1} parent=31 // pred_fallthru
          _
      $region32: #{_lambda_.1} parent=5 // pred_fallthru
        _
      %p224 = scmp.le.s32.totalorder 2, %s12
      // Predicated region
      $region37: #{_lambda_.1} parent=5 // pred_check
        %p225 = pneg %p224
      $region38: #{_lambda_.1} parent=5 // pred_check_branch
        %227 = sbr.rel (%p225) target = $region40
      $region39: #{_lambda_.1} parent=5 // pred_region
        %s228 = ssub.s32 %s12, 2
        // Predicated region
        $region41: #{_lambda_.1} parent=39 // pred_check
          %p229 = pneg %p109
        $region42: #{_lambda_.1} parent=39 // pred_check_branch
          %231 = sbr.rel (%p229) target = $region44
        $region43: #{_lambda_.1} parent=39 // pred_region
          %s232 = sand.u32 %s94, 1
          %s233 = scalar_lea.sflag [#allocation3], %s232
          %s234 = sand.u32 %s94, 1
          %s235 = smul.addr %s234, 8
          %s236 = scalar_lea.vmem [#allocation2], %s235
          %238 = dma.done %s233, 128
        $region44: #{_lambda_.1} parent=39 // pred_fallthru
          _
      $region40: #{_lambda_.1} parent=5 // pred_fallthru
        _
    $region6: #{_lambda_.1} parent=1 // loop_footer
      %s16 = sadd.s32 1, %s12
    $region7: #{_lambda_.1} parent=1 // loop_footer_branch
      %11 = sbr.rel target = $region3
    $region8: #{_lambda_.1} parent=1 // loop_exit
      _
    %239 = vsyncpa [#allocation3], 1
    %s240 = scalar_lea.sflag [#allocation3], 1
    %241 = vsyncpa %s240, 1

</llo_original>
